<compile_context>
chip_gen: v7x
topology: tpu7x:2x2x1
jax: 0.10.0
libtpu: 0.0.40
codegen_flags: <defaults>
</compile_context>

<pallas_src>
import jax
import jax.numpy as jnp
from jax import lax
from jax.experimental import pallas as pl
from jax.experimental.pallas import tpu as pltpu


def make_fuse_block_kernel(K, Nb, H, WC):
    M = Nb * H

    def kernel(w_ref, x_ref, m_ref, shift_ref, o_ref):
        # w_ref    : SMEM (K,)             normalized fuse weights  w_k / (sum(w)+eps)
        # x_ref    : VMEM (Nb, K, H, WC)   bf16 stacked inputs, one contiguous batch block
        # m_ref    : VMEM (3, WC, WC)      banded conv matrix (bf16), BN scale folded in
        # shift_ref: VMEM (1, WC)          folded BN shift (incl. conv bias)
        # o_ref    : VMEM (M, WC)          f32 output rows for this batch block

        # --- FastNormFuse: weighted sum over K maps (f32 elementwise; v5e-safe) ---
        fused = x_ref[:, 0].astype(jnp.float32) * w_ref[0]
        for k in range(1, K):
            fused = fused + x_ref[:, k].astype(jnp.float32) * w_ref[k]
        fused = fused.reshape(M, WC)          # (Nb, H, WC) -> (M, WC); H % 8 == 0 => free

        # --- Swish: x * sigmoid(x).  exp on EUP; exact reciprocal (tight accuracy). ---
        fused = fused * pl.reciprocal(1.0 + jnp.exp(-fused))

        # --- H-direction 3x3 taps via XLU sublane roll + SAME zero-pad row mask.
        #     Rows at batch-element boundaries (h==0 / h==H-1) are zeroed, which also
        #     kills any roll wraparound across batch elements. ---
        row = lax.broadcasted_iota(jnp.int32, (M, WC), 0)
        g_m1 = jnp.where((row % H) == 0, 0.0, pltpu.roll(fused, 1, axis=0))       # fused[h-1]
        g_p1 = jnp.where((row % H) == H - 1, 0.0, pltpu.roll(fused, M - 1, axis=0))  # fused[h+1]

        # --- 3x3 conv (W taps + W zero pad + BN scale folded into m_ref) as three
        #     accumulating bf16 MXU dots with f32 accumulation. ---
        acc = jnp.dot(g_m1.astype(jnp.bfloat16), m_ref[0],
                      preferred_element_type=jnp.float32)
        acc = acc + jnp.dot(fused.astype(jnp.bfloat16), m_ref[1],
                            preferred_element_type=jnp.float32)
        acc = acc + jnp.dot(g_p1.astype(jnp.bfloat16), m_ref[2],
                            preferred_element_type=jnp.float32)

        # --- conv bias + BatchNorm (inference) shift ---
        o_ref[...] = (acc + shift_ref[...]).astype(o_ref.dtype)

    return kernel


def _pick_batch_block(N, H, max_rows=256):
    """Largest Nb dividing N with Nb*H <= max_rows, keeping >=2 grid steps when N>=2
    (so both v7x TensorCores get work)."""
    if H % 8 != 0:
        return 1
    cap = N // 2 if N >= 2 else 1
    best = 1
    for nb in range(1, N + 1):
        if nb > cap:
            break
        if N % nb == 0 and nb * H <= max_rows:
            best = nb
    return best


def fuse_block_forward(x, fuse_w, conv_w_hwio, conv_b,
                       bn_gamma, bn_beta, bn_mean, bn_var,
                       fuse_eps=1e-4, bn_eps=1e-5, max_rows=256):
    """x: (K, N, H, W, C) stacked channels-last feature maps. Returns (N, H, W, C) f32."""
    K, N, H, W, C = x.shape
    WC = W * C
    assert H % 8 == 0, "H must be a multiple of 8 for the flattened (N*H, WC) tiling"

    # --- tiny host-side parameter glue (never touches the big activation twice) ---
    w_norm = (fuse_w / (jnp.sum(fuse_w) + fuse_eps)).astype(jnp.float32)
    inv_std = 1.0 / jnp.sqrt(bn_var + bn_eps)
    scale_c = (bn_gamma * inv_std).astype(jnp.float32)
    shift_c = ((conv_b - bn_mean) * bn_gamma * inv_std + bn_beta).astype(jnp.float32)
    shift = jnp.tile(shift_c, W).reshape(1, WC)

    # Banded conv matrix: M[dh, wi*C+ci, wo*C+co] = K_hwio[dh, wi-wo+1, ci, co] for
    # 0 <= wi-wo+1 <= 2, else 0 (absent taps == SAME zero padding in W).
    # BN scale is folded into the output columns.  bf16 for the MXU.
    wi = jnp.arange(W)[:, None]
    wo = jnp.arange(W)[None, :]
    dw = wi - wo + 1
    valid = (dw >= 0) & (dw <= 2)
    banded = conv_w_hwio[:, jnp.clip(dw, 0, 2), :, :]                 # (3, Wi, Wo, Ci, Co)
    banded = jnp.where(valid[None, :, :, None, None], banded, 0.0)
    m_stack = jnp.transpose(banded, (0, 1, 3, 2, 4)).reshape(3, WC, WC)
    m_stack = (m_stack * jnp.tile(scale_c, W)[None, None, :]).astype(jnp.bfloat16)

    # Contiguous per-step slab layout (N, K, H, W*C), bf16 to halve the HBM read.
    # (In a real pipeline the producer would emit this layout/dtype directly.)
    x_nk = jnp.transpose(x, (1, 0, 2, 3, 4)).reshape(N, K, H, WC).astype(jnp.bfloat16)

    Nb = _pick_batch_block(N, H, max_rows=max_rows)
    grid_n = N // Nb
    M = Nb * H

    # Explicit VMEM budget (double-buffered in/out + constant weights + headroom),
    # clamped to 32 MiB so it is safe on v7x's smaller VMEM.
    in_block_bytes = Nb * K * H * WC * 2
    out_block_bytes = M * WC * 4
    m_bytes = 3 * WC * WC * 2
    vmem_limit = int(min(32 << 20,
                         max(8 << 20,
                             4 * (in_block_bytes + out_block_bytes) + 2 * m_bytes + (2 << 20))))

    kernel = make_fuse_block_kernel(K, Nb, H, WC)
    out = pl.pallas_call(
        kernel,
        out_shape=jax.ShapeDtypeStruct((N * H, WC), jnp.float32),
        grid_spec=pltpu.PrefetchScalarGridSpec(
            num_scalar_prefetch=0,
            grid=(grid_n,),
            in_specs=[
                # fuse weights: tiny scalar table -> SMEM, untiled
                pl.BlockSpec(memory_space=pltpu.MemorySpace.SMEM),
                # stacked inputs: one contiguous (Nb, K, H, WC) slab per grid step
                pl.BlockSpec((Nb, K, H, WC), lambda n: (n, 0, 0, 0)),
                # banded conv weights / folded shift: constant block (fetched once)
                pl.BlockSpec((3, WC, WC), lambda n: (0, 0, 0)),
                pl.BlockSpec((1, WC), lambda n: (0, 0)),
            ],
            out_specs=pl.BlockSpec((M, WC), lambda n: (n, 0)),
        ),
        compiler_params=pltpu.CompilerParams(
            dimension_semantics=("parallel",),
            vmem_limit_bytes=vmem_limit,
        ),
    )(w_norm, x_nk, m_stack, shift)

    return out.reshape(N, H, W, C)   # free reshape back to NHWC


if __name__ == "__main__":
    key = jax.random.PRNGKey(0)
    K, N, C, H, W = 2, 2, 8, 16, 16  # num_weights=2, batch=2, in_channel=8, 16x16
    k1, k2, k3 = jax.random.split(key, 3)

    # Inputs as the PyTorch module would see them (K, N, C, H, W) -> channels-last.
    x_nchw = jax.random.normal(k1, (K, N, C, H, W), jnp.float32)
    x = jnp.transpose(x_nchw, (0, 1, 3, 4, 2))          # (K, N, H, W, C)

    # Deterministic parameter init (matches module __init__ shapes):
    fuse_w = jnp.ones((K,), jnp.float32)                # FastNormFuse init: ones
    conv_w_oihw = 0.1 * jax.random.normal(k2, (C, C, 3, 3), jnp.float32)
    conv_w_hwio = jnp.transpose(conv_w_oihw, (2, 3, 1, 0))     # OIHW -> HWIO
    conv_b = 0.1 * jax.random.normal(k3, (C,), jnp.float32)
    bn_gamma = jnp.ones((C,), jnp.float32)              # BatchNorm2d defaults
    bn_beta = jnp.zeros((C,), jnp.float32)
    bn_mean = jnp.zeros((C,), jnp.float32)
    bn_var = jnp.ones((C,), jnp.float32)

    out = fuse_block_forward(x, fuse_w, conv_w_hwio, conv_b,
                             bn_gamma, bn_beta, bn_mean, bn_var)
    out = jax.block_until_ready(out)

    # Plain-JAX f32 reference.
    w_norm = fuse_w / (jnp.sum(fuse_w) + 1e-4)
    fused = jnp.einsum('k,knhwc->nhwc', w_norm, x)
    fused = fused * jax.nn.sigmoid(fused)
    conv = lax.conv_general_dilated(fused, conv_w_hwio, (1, 1), 'SAME',
                                    dimension_numbers=('NHWC', 'HWIO', 'NHWC'))
    inv_std = 1.0 / jnp.sqrt(bn_var + 1e-5)
    ref = (conv + conv_b - bn_mean) * (bn_gamma * inv_std) + bn_beta

    assert out.shape == (N, H, W, C)
    # bf16 activations + bf16 MXU inputs => loose-ish tolerance.
    err = float(jnp.max(jnp.abs(out - ref)))
    assert jnp.allclose(out, ref, atol=5e-2, rtol=5e-2), err
    print("KERNEL_OK")
</pallas_src>

<mosaic_0001>
module attributes {stable_mosaic.version = 11 : i64} {
  func.func @kernel(%arg0: i32, %arg1: memref<2xf32, #tpu.memory_space<smem>>, %arg2: memref<1x2x16x128xbf16, #tpu.memory_space<vmem>>, %arg3: memref<3x128x128xbf16, #tpu.memory_space<vmem>>, %arg4: memref<1x128xf32, #tpu.memory_space<vmem>>, %arg5: memref<16x128xf32, #tpu.memory_space<vmem>>) attributes {dimension_semantics = [#tpu.dimension_semantics<parallel>], iteration_bounds = array<i64: 2>, scalar_prefetch = 0 : i64, scratch_operands = 0 : i64, tpu.core_type = #tpu.core_type<tc>, window_params = [{transform_indices = @transform_0, window_bounds = array<i64: 2>}, {transform_indices = @transform_1, window_bounds = array<i64: 1, 2, 16, 128>}, {pipeline_mode = #tpu.pipeline_mode<synchronous>, transform_indices = @transform_2, window_bounds = array<i64: 3, 128, 128>}, {pipeline_mode = #tpu.pipeline_mode<synchronous>, transform_indices = @transform_3, window_bounds = array<i64: 1, 128>}, {transform_indices = @transform_4, window_bounds = array<i64: 16, 128>}]} {
    %c0 = arith.constant 0 : index
    %c0_0 = arith.constant 0 : index
    %c0_1 = arith.constant 0 : index
    %c0_2 = arith.constant 0 : index
    %0 = vector.load %arg2[%c0, %c0_0, %c0_1, %c0_2] : memref<1x2x16x128xbf16, #tpu.memory_space<vmem>>, vector<1x1x16x128xbf16>
    %1 = vector.shape_cast %0 : vector<1x1x16x128xbf16> to vector<1x16x128xbf16>
    %2 = arith.extf %1 : vector<1x16x128xbf16> to vector<1x16x128xf32>
    %c0_3 = arith.constant 0 : index
    %3 = memref.load %arg1[%c0_3] : memref<2xf32, #tpu.memory_space<smem>>
    %4 = vector.broadcast %3 : f32 to vector<1x16x128xf32>
    %5 = arith.mulf %2, %4 : vector<1x16x128xf32>
    %c0_4 = arith.constant 0 : index
    %c1 = arith.constant 1 : index
    %c0_5 = arith.constant 0 : index
    %c0_6 = arith.constant 0 : index
    %6 = vector.load %arg2[%c0_4, %c1, %c0_5, %c0_6] : memref<1x2x16x128xbf16, #tpu.memory_space<vmem>>, vector<1x1x16x128xbf16>
    %7 = vector.shape_cast %6 : vector<1x1x16x128xbf16> to vector<1x16x128xbf16>
    %8 = arith.extf %7 : vector<1x16x128xbf16> to vector<1x16x128xf32>
    %c1_7 = arith.constant 1 : index
    %9 = memref.load %arg1[%c1_7] : memref<2xf32, #tpu.memory_space<smem>>
    %10 = vector.broadcast %9 : f32 to vector<1x16x128xf32>
    %11 = arith.mulf %8, %10 : vector<1x16x128xf32>
    %12 = arith.addf %5, %11 : vector<1x16x128xf32>
    %13 = vector.shape_cast %12 : vector<1x16x128xf32> to vector<16x128xf32>
    %cst = arith.constant 0.000000e+00 : f32
    %14 = vector.broadcast %cst : f32 to vector<16x128xf32>
    %15 = arith.subf %14, %13 : vector<16x128xf32>
    %16 = math.exp %15 : vector<16x128xf32>
    %cst_8 = arith.constant 1.000000e+00 : f32
    %17 = vector.broadcast %cst_8 : f32 to vector<16x128xf32>
    %18 = arith.addf %17, %16 : vector<16x128xf32>
    %19 = tpu.reciprocal %18 : vector<16x128xf32> -> vector<16x128xf32>
    %20 = arith.mulf %13, %19 : vector<16x128xf32>
    %21 = tpu.iota {dimensions = array<i32: 0>} : vector<16x128xi32>
    %c16_i32 = arith.constant 16 : i32
    %c0_i32 = arith.constant 0 : i32
    %22 = arith.cmpi eq, %c16_i32, %c0_i32 : i32
    %c1_i32 = arith.constant 1 : i32
    %23 = arith.select %22, %c1_i32, %c16_i32 : i32
    %24 = vector.broadcast %23 : i32 to vector<16x128xi32>
    %25 = arith.remsi %21, %24 : vector<16x128xi32>
    %c0_i32_9 = arith.constant 0 : i32
    %26 = vector.broadcast %c0_i32_9 : i32 to vector<16x128xi32>
    %27 = arith.cmpi ne, %25, %26 : vector<16x128xi32>
    %c0_i32_10 = arith.constant 0 : i32
    %28 = vector.broadcast %c0_i32_10 : i32 to vector<16x128xi32>
    %29 = arith.cmpi slt, %25, %28 : vector<16x128xi32>
    %c0_i32_11 = arith.constant 0 : i32
    %30 = arith.cmpi slt, %23, %c0_i32_11 : i32
    %31 = vector.broadcast %30 : i1 to vector<16x128xi1>
    %32 = vector.broadcast %31 : vector<16x128xi1> to vector<16x128xi1>
    %33 = arith.xori %29, %32 : vector<16x128xi1>
    %34 = arith.andi %33, %27 : vector<16x128xi1>
    %35 = vector.broadcast %23 : i32 to vector<16x128xi32>
    %36 = arith.addi %25, %35 : vector<16x128xi32>
    %37 = arith.select %34, %36, %25 : vector<16x128xi1>, vector<16x128xi32>
    %c0_i32_12 = arith.constant 0 : i32
    %38 = vector.broadcast %c0_i32_12 : i32 to vector<16x128xi32>
    %39 = arith.cmpi eq, %37, %38 : vector<16x128xi32>
    %c1_i32_13 = arith.constant 1 : i32
    %40 = tpu.dynamic_rotate %20 by %c1_i32_13 dim 0 : vector<16x128xf32>, i32 -> vector<16x128xf32>
    %cst_14 = arith.constant 0.000000e+00 : f32
    %41 = vector.broadcast %cst_14 : f32 to vector<16x128xf32>
    %42 = arith.select %39, %41, %40 : vector<16x128xi1>, vector<16x128xf32>
    %c16_i32_15 = arith.constant 16 : i32
    %c0_i32_16 = arith.constant 0 : i32
    %43 = arith.cmpi eq, %c16_i32_15, %c0_i32_16 : i32
    %c1_i32_17 = arith.constant 1 : i32
    %44 = arith.select %43, %c1_i32_17, %c16_i32_15 : i32
    %45 = vector.broadcast %44 : i32 to vector<16x128xi32>
    %46 = arith.remsi %21, %45 : vector<16x128xi32>
    %c0_i32_18 = arith.constant 0 : i32
    %47 = vector.broadcast %c0_i32_18 : i32 to vector<16x128xi32>
    %48 = arith.cmpi ne, %46, %47 : vector<16x128xi32>
    %c0_i32_19 = arith.constant 0 : i32
    %49 = vector.broadcast %c0_i32_19 : i32 to vector<16x128xi32>
    %50 = arith.cmpi slt, %46, %49 : vector<16x128xi32>
    %c0_i32_20 = arith.constant 0 : i32
    %51 = arith.cmpi slt, %44, %c0_i32_20 : i32
    %52 = vector.broadcast %51 : i1 to vector<16x128xi1>
    %53 = vector.broadcast %52 : vector<16x128xi1> to vector<16x128xi1>
    %54 = arith.xori %50, %53 : vector<16x128xi1>
    %55 = arith.andi %54, %48 : vector<16x128xi1>
    %56 = vector.broadcast %44 : i32 to vector<16x128xi32>
    %57 = arith.addi %46, %56 : vector<16x128xi32>
    %58 = arith.select %55, %57, %46 : vector<16x128xi1>, vector<16x128xi32>
    %c15_i32 = arith.constant 15 : i32
    %59 = vector.broadcast %c15_i32 : i32 to vector<16x128xi32>
    %60 = arith.cmpi eq, %58, %59 : vector<16x128xi32>
    %c15_i32_21 = arith.constant 15 : i32
    %61 = tpu.dynamic_rotate %20 by %c15_i32_21 dim 0 : vector<16x128xf32>, i32 -> vector<16x128xf32>
    %cst_22 = arith.constant 0.000000e+00 : f32
    %62 = vector.broadcast %cst_22 : f32 to vector<16x128xf32>
    %63 = arith.select %60, %62, %61 : vector<16x128xi1>, vector<16x128xf32>
    %64 = arith.truncf %42 : vector<16x128xf32> to vector<16x128xbf16>
    %c0_23 = arith.constant 0 : index
    %c0_24 = arith.constant 0 : index
    %c0_25 = arith.constant 0 : index
    %65 = vector.load %arg3[%c0_23, %c0_24, %c0_25] : memref<3x128x128xbf16, #tpu.memory_space<vmem>>, vector<1x128x128xbf16>
    %66 = vector.shape_cast %65 : vector<1x128x128xbf16> to vector<128x128xbf16>
    %cst_26 = arith.constant dense<0.000000e+00> : vector<16x128xf32>
    %67 = tpu.matmul %64, %66, %cst_26 {dimension_numbers = #tpu.dot_dimension_numbers<[1], [0], [0], [1], [0, 0, 1, 1], [], []>} : vector<16x128xbf16>, vector<128x128xbf16>, vector<16x128xf32> -> vector<16x128xf32>
    %68 = arith.truncf %20 : vector<16x128xf32> to vector<16x128xbf16>
    %c1_27 = arith.constant 1 : index
    %c0_28 = arith.constant 0 : index
    %c0_29 = arith.constant 0 : index
    %69 = vector.load %arg3[%c1_27, %c0_28, %c0_29] : memref<3x128x128xbf16, #tpu.memory_space<vmem>>, vector<1x128x128xbf16>
    %70 = vector.shape_cast %69 : vector<1x128x128xbf16> to vector<128x128xbf16>
    %cst_30 = arith.constant dense<0.000000e+00> : vector<16x128xf32>
    %71 = tpu.matmul %68, %70, %cst_30 {dimension_numbers = #tpu.dot_dimension_numbers<[1], [0], [0], [1], [0, 0, 1, 1], [], []>} : vector<16x128xbf16>, vector<128x128xbf16>, vector<16x128xf32> -> vector<16x128xf32>
    %72 = arith.addf %67, %71 : vector<16x128xf32>
    %73 = arith.truncf %63 : vector<16x128xf32> to vector<16x128xbf16>
    %c2 = arith.constant 2 : index
    %c0_31 = arith.constant 0 : index
    %c0_32 = arith.constant 0 : index
    %74 = vector.load %arg3[%c2, %c0_31, %c0_32] : memref<3x128x128xbf16, #tpu.memory_space<vmem>>, vector<1x128x128xbf16>
    %75 = vector.shape_cast %74 : vector<1x128x128xbf16> to vector<128x128xbf16>
    %cst_33 = arith.constant dense<0.000000e+00> : vector<16x128xf32>
    %76 = tpu.matmul %73, %75, %cst_33 {dimension_numbers = #tpu.dot_dimension_numbers<[1], [0], [0], [1], [0, 0, 1, 1], [], []>} : vector<16x128xbf16>, vector<128x128xbf16>, vector<16x128xf32> -> vector<16x128xf32>
    %77 = arith.addf %72, %76 : vector<16x128xf32>
    %c0_34 = arith.constant 0 : index
    %c0_35 = arith.constant 0 : index
    %78 = vector.load %arg4[%c0_34, %c0_35] : memref<1x128xf32, #tpu.memory_space<vmem>>, vector<1x128xf32>
    %79 = vector.broadcast %78 : vector<1x128xf32> to vector<16x128xf32>
    %80 = arith.addf %77, %79 : vector<16x128xf32>
    %c0_36 = arith.constant 0 : index
    %c0_37 = arith.constant 0 : index
    %81 = vector.load %arg5[%c0_36, %c0_37] : memref<16x128xf32, #tpu.memory_space<vmem>>, vector<16x128xf32>
    tpu.vector_store %arg5[%c0_36, %c0_37], %80 {strides = array<i32>} : memref<16x128xf32, #tpu.memory_space<vmem>>, vector<16x128xf32>,
    return
  }
  func.func @transform_0(%arg0: i32) -> i32 {
    %c0_i32 = arith.constant 0 : i32
    %c0_i32_0 = arith.constant 0 : i32
    return %c0_i32 : i32
  }
  func.func @transform_1(%arg0: i32) -> (i32, i32, i32, i32) {
    %c0_i32 = arith.constant 0 : i32
    %c0_i32_0 = arith.constant 0 : i32
    %c0_i32_1 = arith.constant 0 : i32
    %c0_i32_2 = arith.constant 0 : i32
    return %arg0, %c0_i32, %c0_i32_0, %c0_i32_1 : i32, i32, i32, i32
  }
  func.func @transform_2(%arg0: i32) -> (i32, i32, i32) {
    %c0_i32 = arith.constant 0 : i32
    %c0_i32_0 = arith.constant 0 : i32
    %c0_i32_1 = arith.constant 0 : i32
    %c0_i32_2 = arith.constant 0 : i32
    return %c0_i32, %c0_i32_0, %c0_i32_1 : i32, i32, i32
  }
  func.func @transform_3(%arg0: i32) -> (i32, i32) {
    %c0_i32 = arith.constant 0 : i32
    %c0_i32_0 = arith.constant 0 : i32
    %c0_i32_1 = arith.constant 0 : i32
    return %c0_i32, %c0_i32_0 : i32, i32
  }
  func.func @transform_4(%arg0: i32) -> (i32, i32) {
    %c0_i32 = arith.constant 0 : i32
    %c0_i32_0 = arith.constant 0 : i32
    return %arg0, %c0_i32 : i32, i32
  }
}

</mosaic_0001>

<llo_original>
// kernel: tpu_custom_call.1
$region0: #{tpu_custom_call.1}
  #allocation0 [shape = 'u32[]', space=smem, size = 0x4, offset = 0x4, fixed_abs, tag = 'smem constant byte address 0x4 - core index']
  #allocation1 [shape = 'u32[144,128]{1,0:T(1,128)}', space=vmem, size = 0x12000, scoped, tag = 'internal scratch']
  %s0 = inlined_call_operand.hbm [shape: f32[2], index: 0, kind: input, shape index: {}]
  %s1 = inlined_call_operand.hbm [shape: bf16[2,2,16,128], index: 1, kind: input, shape index: {}]
  %s2 = inlined_call_operand.hbm [shape: bf16[3,128,128], index: 2, kind: input, shape index: {}]
  %s3 = inlined_call_operand.vmem [shape: f32[1,128], index: 3, kind: input, shape index: {}]
  %s4 = inlined_call_operand.hbm [shape: f32[32,128], index: 4, kind: output, shape index: {}]
  %s5 = sld [smem:[#allocation0]]
  $region61: #{tpu_custom_call.1} parent=0
    _
  %s7 = ssub.s32 1, %s5
  %s8 = scalar_select 0, %s7, %s5
  $region1: #{tpu_custom_call.1} parent=0
    #allocation2 [shape = 'u8[512]{0}', space=smem, size = 0x200, scoped, tag = 'input window, operand 0, single buffered']
    #allocation3 [shape = 's32[2]{0}', space=sflag, size = 0x8, scoped, tag = 'scoped memory for tpu_custom_call.1']
    #allocation4 [shape = 's32[2]{0}', space=sflag, size = 0x8, scoped, tag = 'scoped memory for tpu_custom_call.1']
    #allocation5 [shape = 's32[2]{0}', space=sflag, size = 0x8, scoped, tag = 'scoped memory for tpu_custom_call.1']
    #allocation6 [shape = 'u8[16384]{0}', space=vmem, size = 0x4000, scoped, tag = 'input window, operand 1']
    #allocation7 [shape = 'u8[98304]{0}', space=vmem, size = 0x18000, scoped, tag = 'input window, operand 2, single buffered']
    #allocation8 [shape = 's32[1]{0}', space=sflag, size = 0x4, scoped, tag = 'scoped memory for tpu_custom_call.1']
    #allocation9 [shape = 'u8[16384]{0}', space=vmem, size = 0x4000, scoped, tag = 'output window, operand 0']
    %9 = vsyncpa [#allocation5], 0
    %10 = vsyncpa [#allocation3], 0
    %s11 = scalar_lea.sflag [#allocation3], 1
    %12 = vsyncpa %s11, 0
    %13 = vsyncpa [#allocation8], 0
    %14 = vsyncpa [#allocation4], 0
    %s15 = scalar_lea.sflag [#allocation4], 1
    %16 = vsyncpa %s15, 0
    loop: start=0, step=1, limit=4
    $region2: #{tpu_custom_call.1} parent=1 // loop_pre_header
      _
    $region3: #{tpu_custom_call.1} parent=1 // loop_header
      %s18 = sphi 0, %s22
      %p19 = scmp.ge.s32.totalorder %s18, 4
      %s26 = sphi 0, %s26
      %s28 = sphi 0, %s26
      %s29 = sphi 0, %s28
      %s43 = sphi 0, %s29
      %s49 = sphi 0, %s51
      %s52 = sphi 0, %s49
      %s53 = sphi 0, %s52
      %s69 = sphi 0, %s53
      %s73 = sphi 0, %s73
      %s75 = sphi 0, %s73
      %s76 = sphi 0, %s75
      %s90 = sphi 0, %s76
      %s94 = sphi 0, %s94
      %s96 = sphi 0, %s94
      %s97 = sphi 0, %s96
      %s111 = sphi 0, %s97
      %s117 = sphi 0, %s119
      %s120 = sphi 0, %s117
      %s121 = sphi 0, %s120
      %s137 = sphi 0, %s121
    $region4: #{tpu_custom_call.1} parent=1 // loop_header_branch
      %21 = sbr.rel (%p19) target = $region8
    $region5: #{tpu_custom_call.1} parent=1 // loop_body
      %s23 = ssub.s32 %s18, 1
      %s24 = ssub.s32 %s18, 2
      %s25 = sadd.s32 %s18, 1
      %s27 = sadd.s32 %s26, 1
      %p30 = scmp.eq.s32.totalorder %s18, 1
      %p31 = scmp.ne.s32.totalorder %s26, %s28
      %p32 = scmp.eq.s32.totalorder %s18, 0
      %p33 = por %p31, %p32
      %p34 = scmp.ne.s32.totalorder %s26, %s28
      %p35 = scmp.eq.s32.totalorder %s23, 1
      %p36 = por %p34, %p35
      %p37 = scmp.ne.s32.totalorder %s28, %s29
      %p38 = scmp.eq.s32.totalorder %s23, 0
      %p39 = por %p37, %p38
      %p40 = scmp.ne.s32.totalorder %s28, %s29
      %p41 = scmp.eq.s32.totalorder %s24, 1
      %p42 = por %p40, %p41
      %p44 = scmp.ne.s32.totalorder %s29, %s43
      %p45 = scmp.eq.s32.totalorder %s24, 0
      %p46 = por %p44, %p45
      %s47 = ssub.s32 %s18, %s25
      %p48 = scmp.eq.s32.totalorder %s47, 0
      %s50 = sadd.s32 %s49, 1
      %s51 = scalar_select %p48, %s49, %s50
      %p54 = pneg %p48
      %p55 = scmp.eq.s32.totalorder %s18, 1
      %p56 = por %p54, %p55
      %p57 = scmp.ne.s32.totalorder %s49, %s52
      %p58 = scmp.eq.s32.totalorder %s18, 0
      %p59 = por %p57, %p58
      %p60 = scmp.ne.s32.totalorder %s49, %s52
      %p61 = scmp.eq.s32.totalorder %s23, 1
      %p62 = por %p60, %p61
      %p63 = scmp.ne.s32.totalorder %s52, %s53
      %p64 = scmp.eq.s32.totalorder %s23, 0
      %p65 = por %p63, %p64
      %p66 = scmp.ne.s32.totalorder %s52, %s53
      %p67 = scmp.eq.s32.totalorder %s24, 1
      %p68 = por %p66, %p67
      %p70 = scmp.ne.s32.totalorder %s53, %s69
      %p71 = scmp.eq.s32.totalorder %s24, 0
      %p72 = por %p70, %p71
      %s74 = sadd.s32 %s73, 1
      %p77 = scmp.eq.s32.totalorder %s18, 1
      %p78 = scmp.ne.s32.totalorder %s73, %s75
      %p79 = scmp.eq.s32.totalorder %s18, 0
      %p80 = por %p78, %p79
      %p81 = scmp.ne.s32.totalorder %s73, %s75
      %p82 = scmp.eq.s32.totalorder %s23, 1
      %p83 = por %p81, %p82
      %p84 = scmp.ne.s32.totalorder %s75, %s76
      %p85 = scmp.eq.s32.totalorder %s23, 0
      %p86 = por %p84, %p85
      %p87 = scmp.ne.s32.totalorder %s75, %s76
      %p88 = scmp.eq.s32.totalorder %s24, 1
      %p89 = por %p87, %p88
      %p91 = scmp.ne.s32.totalorder %s76, %s90
      %p92 = scmp.eq.s32.totalorder %s24, 0
      %p93 = por %p91, %p92
      %s95 = sadd.s32 %s94, 1
      %p98 = scmp.eq.s32.totalorder %s18, 1
      %p99 = scmp.ne.s32.totalorder %s94, %s96
      %p100 = scmp.eq.s32.totalorder %s18, 0
      %p101 = por %p99, %p100
      %p102 = scmp.ne.s32.totalorder %s94, %s96
      %p103 = scmp.eq.s32.totalorder %s23, 1
      %p104 = por %p102, %p103
      %p105 = scmp.ne.s32.totalorder %s96, %s97
      %p106 = scmp.eq.s32.totalorder %s23, 0
      %p107 = por %p105, %p106
      %p108 = scmp.ne.s32.totalorder %s96, %s97
      %p109 = scmp.eq.s32.totalorder %s24, 1
      %p110 = por %p108, %p109
      %p112 = scmp.ne.s32.totalorder %s97, %s111
      %p113 = scmp.eq.s32.totalorder %s24, 0
      %p114 = por %p112, %p113
      %s115 = ssub.s32 %s18, %s25
      %p116 = scmp.eq.s32.totalorder %s115, 0
      %s118 = sadd.s32 %s117, 1
      %s119 = scalar_select %p116, %s117, %s118
      %p122 = pneg %p116
      %p123 = scmp.eq.s32.totalorder %s18, 1
      %p124 = por %p122, %p123
      %p125 = scmp.ne.s32.totalorder %s117, %s120
      %p126 = scmp.eq.s32.totalorder %s18, 0
      %p127 = por %p125, %p126
      %p128 = scmp.ne.s32.totalorder %s117, %s120
      %p129 = scmp.eq.s32.totalorder %s23, 1
      %p130 = por %p128, %p129
      %p131 = scmp.ne.s32.totalorder %s120, %s121
      %p132 = scmp.eq.s32.totalorder %s23, 0
      %p133 = por %p131, %p132
      %p134 = scmp.ne.s32.totalorder %s120, %s121
      %p135 = scmp.eq.s32.totalorder %s24, 1
      %p136 = por %p134, %p135
      %p138 = scmp.ne.s32.totalorder %s121, %s137
      %p139 = scmp.eq.s32.totalorder %s24, 0
      %p140 = por %p138, %p139
      %p141 = scmp.le.s32.totalorder 1, %s18
      %p142 = scmp.lt.s32.totalorder %s18, 3
      %p143 = pnand %p141, %p142
      %p144 = pneg %p143
      // Predicated region
      $region9: #{tpu_custom_call.1} parent=5 // pred_check
        _
      $region10: #{tpu_custom_call.1} parent=5 // pred_check_branch
        %146 = sbr.rel (%p143) target = $region12
      $region11: #{tpu_custom_call.1} parent=5 // pred_region
        %s147 = ssub.s32 %s18, 1
        // Predicated region
        $region13: #{tpu_custom_call.1} parent=11 // pred_check
          %p148 = pneg %p39
        $region14: #{tpu_custom_call.1} parent=11 // pred_check_branch
          %150 = sbr.rel (%p148) target = $region16
        $region15: #{tpu_custom_call.1} parent=11 // pred_region
          %s152 = ssub.s32 16, 16
          %153 = vsyncadd [#allocation5], %s152
          %156 = dma.hbm_to_smem %s0, 16, [#allocation2], [#allocation5]
        $region16: #{tpu_custom_call.1} parent=11 // pred_fallthru
          _
        // Predicated region
        $region17: #{tpu_custom_call.1} parent=11 // pred_check
          %p157 = pneg %p86
        $region18: #{tpu_custom_call.1} parent=11 // pred_check_branch
          %159 = sbr.rel (%p157) target = $region20
        $region19: #{tpu_custom_call.1} parent=11 // pred_region
          %s161 = ssub.s32 3072, 3072
          %162 = vsyncadd [#allocation8], %s161
          %s163 = sshll.u32 [#allocation7], 4
          %s164 = int_to_ptr.vmem [resolvable:$true] %s163
          %169 = dma.hbm_to_vmem [thread:$0]  %s2, 3072, %s164, [#allocation8], 64, 64, 4
        $region20: #{tpu_custom_call.1} parent=11 // pred_fallthru
          _
        // Predicated region
        $region21: #{tpu_custom_call.1} parent=11 // pred_check
          %p170 = pneg %p107
        $region22: #{tpu_custom_call.1} parent=11 // pred_check_branch
          %172 = sbr.rel (%p170) target = $region24
        $region23: #{tpu_custom_call.1} parent=11 // pred_region
          _
        $region24: #{tpu_custom_call.1} parent=11 // pred_fallthru
          _
      $region12: #{tpu_custom_call.1} parent=5 // pred_fallthru
        _
      %p173 = scmp.lt.s32.totalorder %s18, 2
      // Predicated region
      $region25: #{tpu_custom_call.1} parent=5 // pred_check
        %p174 = pneg %p173
      $region26: #{tpu_custom_call.1} parent=5 // pred_check_branch
        %176 = sbr.rel (%p174) target = $region28
      $region27: #{tpu_custom_call.1} parent=5 // pred_region
        // Predicated region
        $region29: #{tpu_custom_call.1} parent=27 // pred_check
          %p177 = pneg %p59
        $region30: #{tpu_custom_call.1} parent=27 // pred_check_branch
          %179 = sbr.rel (%p177) target = $region32
        $region31: #{tpu_custom_call.1} parent=27 // pred_region
          %s180 = sand.u32 %s49, 1
          %s181 = scalar_lea.sflag [#allocation3], %s180
          %s182 = sand.u32 %s49, 1
          %s183 = smul.addr %s182, 16
          %s184 = scalar_lea.vmem [#allocation6], %s183
          %s186 = ssub.s32 256, 256
          %187 = vsyncadd %s181, %s186
          %s188 = smul.addr %s18, 4
          %s189 = smul.addr %s188, 64
          %s190 = scalar_lea.hbm %s1, %s189
          %s191 = sshll.u32 %s184, 4
          %s192 = int_to_ptr.vmem [resolvable:$true] %s191
          %197 = dma.hbm_to_vmem [thread:$0]  %s190, 256, %s192, %s181, 64, 64, 4
        $region32: #{tpu_custom_call.1} parent=27 // pred_fallthru
          _
      $region28: #{tpu_custom_call.1} parent=5 // pred_fallthru
        _
      %p198 = scmp.le.s32.totalorder 1, %s18
      %p199 = scmp.lt.s32.totalorder %s18, 3
      %p200 = pnand %p198, %p199
      %p201 = pneg %p200
      // Predicated region
      $region33: #{tpu_custom_call.1} parent=5 // pred_check
        _
      $region34: #{tpu_custom_call.1} parent=5 // pred_check_branch
        %203 = sbr.rel (%p200) target = $region36
      $region35: #{tpu_custom_call.1} parent=5 // pred_region
        %s204 = ssub.s32 %s18, 1
        // Predicated region
        $region37: #{tpu_custom_call.1} parent=35 // pred_check
          %p205 = pneg %p39
        $region38: #{tpu_custom_call.1} parent=35 // pred_check_branch
          %207 = sbr.rel (%p205) target = $region40
        $region39: #{tpu_custom_call.1} parent=35 // pred_region
          %208 = dma.done [#allocation5], 16
        $region40: #{tpu_custom_call.1} parent=35 // pred_fallthru
          _
        %s209 = sand.u32 %s52, 1
        %s210 = scalar_lea.sflag [#allocation3], %s209
        %s211 = sand.u32 %s52, 1
        %s212 = smul.addr %s211, 16
        %s213 = scalar_lea.vmem [#allocation6], %s212
        // Predicated region
        $region41: #{tpu_custom_call.1} parent=35 // pred_check
          %p214 = pneg %p65
        $region42: #{tpu_custom_call.1} parent=35 // pred_check_branch
          %216 = sbr.rel (%p214) target = $region44
        $region43: #{tpu_custom_call.1} parent=35 // pred_region
          %217 = dma.done %s210, 256
        $region44: #{tpu_custom_call.1} parent=35 // pred_fallthru
          _
        // Predicated region
        $region45: #{tpu_custom_call.1} parent=35 // pred_check
          %p218 = pneg %p86
        $region46: #{tpu_custom_call.1} parent=35 // pred_check_branch
          %220 = sbr.rel (%p218) target = $region48
        $region47: #{tpu_custom_call.1} parent=35 // pred_region
          %221 = dma.done [#allocation8], 3072
        $region48: #{tpu_custom_call.1} parent=35 // pred_fallthru
          _
        %222 = sfence
        %p223 = pneg %p39
        %p224 = pneg %p36
        %s225 = sand.u32 %s52, 1
        %s226 = scalar_lea.sflag [#allocation3], %s225
        %s227 = sand.u32 %s52, 1
        %s228 = smul.addr %s227, 16
        %s229 = scalar_lea.vmem [#allocation6], %s228
        %p230 = pneg %p65
        %p231 = pneg %p62
        %p232 = pneg %p86
        %p233 = pneg %p83
        %p234 = pneg %p107
        %p235 = pneg %p104
        %p236 = pneg %p133
        %p237 = pneg %p130
        %s238 = sand.u32 %s120, 1
        %s239 = scalar_lea.sflag [#allocation4], %s238
        %s240 = sand.u32 %s120, 1
        %s241 = smul.addr %s240, 16
        %s242 = scalar_lea.vmem [#allocation9], %s241
        %s243 = smul.u32 2, %s23
        %v245 = vld [vmem:[%s213] sm:$0xf]
        %v246 = vld [vmem:[%s213 + $0x4] sm:$0xf]
        %v247 = vunpack.c.l.bf16 %v245
        %v248 = vunpack.c.l.bf16 %v246
        %s249 = sld [smem:[#allocation2]]
        %v250 = vstv %s249
        %v251 = vmul.f32 %v247, %v250
        %v252 = vmul.f32 %v248, %v250
        %s253 = scalar_lea.vmem %s213, 8 [#allocation6]
        %v254 = vld [vmem:[%s253] sm:$0xf]
        %v255 = vld [vmem:[%s253 + $0x4] sm:$0xf]
        %v256 = vunpack.c.l.bf16 %v254
        %v257 = vunpack.c.l.bf16 %v255
        %s258 = sld [smem:[#allocation2 + $0x1]]
        %v259 = vstv %s258
        %v260 = vmul.f32 %v256, %v259
        %v261 = vmul.f32 %v257, %v259
        %v262 = vadd.f32 %v251, %v260
        %v263 = vadd.f32 %v252, %v261
        %v264 = vsub.f32 0.0, %v262
        %v265 = vsub.f32 0.0, %v263
        %v266 = vmul.f32 %v264, 1.442695
        %v267 = vpow.pop %v266
        %v268 = vmul.f32 %v265, 1.442695
        %v269 = vpow.pop %v268
        %v270 = vadd.f32 %v267, 1.0
        %v271 = vadd.f32 %v269, 1.0
        %v272 = vrcp.pop %v270
        %v273 = vrcp.pop %v271
        %v274 = vmul.f32 %v262, %v272
        %v275 = vmul.f32 %v263, %v273
        %v276 = vlaneseq
        %v277 = vshrl.u32 %v276, 7
        %v278 = vadd.s32 %v277, 8
        %vm279 = vcmp.lt.s32.totalorder %v277, 0
        %v280 = vsub.s32 0, %v277
        %v281 = vsel %vm279, %v280, %v277
        %v282 = vshrl.u32 %v281, 4
        %v283 = vand.u32 %v281, 15
        %v284 = vsub.s32 0, %v283
        %v285 = vsel %vm279, %v284, %v283
        %vm286 = vcmp.lt.s32.totalorder %v278, 0
        %v287 = vsub.s32 0, %v278
        %v288 = vsel %vm286, %v287, %v278
        %v289 = vshrl.u32 %v288, 4
        %v290 = vand.u32 %v288, 15
        %v291 = vsub.s32 0, %v290
        %v292 = vsel %vm286, %v291, %v290
        %vm293 = vcmp.ne.s32.totalorder %v285, 0
        %vm294 = vcmp.ne.s32.totalorder %v292, 0
        %vm295 = vcmp.lt.s32.totalorder %v285, 0
        %vm296 = vcmp.lt.s32.totalorder %v292, 0
        %vm297 = vmand %vm295, %vm293
        %vm298 = vmand %vm296, %vm294
        %v299 = vadd.s32 %v285, 16
        %v300 = vadd.s32 %v292, 16
        %v301 = vsel %vm297, %v299, %v285
        %v302 = vsel %vm298, %v300, %v292
        %vm303 = vcmp.eq.s32.totalorder %v301, 0
        %vm304 = vcmp.eq.s32.totalorder %v302, 0
        %v305 = vrot.slane %v274, 7
        %v306 = vrot.slane %v275, 7
        %vm307 = vcmp.lt.s32.totalorder %v277, 1
        %v308 = vsel %vm307, %v305, %v306
        %v309 = vsel %vm307, %v306, %v305
        %v310 = vsel %vm303, 0.0, %v309
        %v311 = vsel %vm304, 0.0, %v308
        %vm312 = vcmp.eq.s32.totalorder %v301, 15
        %vm313 = vcmp.eq.s32.totalorder %v302, 15
        %v314 = vrot.slane %v274, 1
        %v315 = vrot.slane %v275, 1
        %vm316 = vcmp.lt.s32.totalorder %v277, 7
        %v317 = vsel %vm316, %v314, %v315
        %v318 = vsel %vm316, %v315, %v314
        %v319 = vsel %vm312, 0.0, %v317
        %v320 = vsel %vm313, 0.0, %v318
        %v321 = vpack.c.bf16 %v311, %v310
        %v322 = vld [vmem:[#allocation7] sm:$0xf]
        %v323 = vld [vmem:[#allocation7 + $0x4] sm:$0xf]
        %v324 = vld [vmem:[#allocation7 + $0x8] sm:$0xf]
        %v325 = vld [vmem:[#allocation7 + $0xc] sm:$0xf]
        %v326 = vld [vmem:[#allocation7 + $0x10] sm:$0xf]
        %v327 = vld [vmem:[#allocation7 + $0x14] sm:$0xf]
        %v328 = vld [vmem:[#allocation7 + $0x18] sm:$0xf]
        %v329 = vld [vmem:[#allocation7 + $0x1c] sm:$0xf]
        %v330 = vld [vmem:[#allocation7 + $0x20] sm:$0xf]
        %v331 = vld [vmem:[#allocation7 + $0x24] sm:$0xf]
        %v332 = vld [vmem:[#allocation7 + $0x28] sm:$0xf]
        %v333 = vld [vmem:[#allocation7 + $0x2c] sm:$0xf]
        %v334 = vld [vmem:[#allocation7 + $0x30] sm:$0xf]
        %v335 = vld [vmem:[#allocation7 + $0x34] sm:$0xf]
        %v336 = vld [vmem:[#allocation7 + $0x38] sm:$0xf]
        %v337 = vld [vmem:[#allocation7 + $0x3c] sm:$0xf]
        %v338 = vpack.c.bf16 %v275, %v274
        %s339 = scalar_lea.vmem [#allocation7], 64
        %v340 = vld [vmem:[%s339] sm:$0xf]
        %v341 = vld [vmem:[%s339 + $0x4] sm:$0xf]
        %v342 = vld [vmem:[%s339 + $0x8] sm:$0xf]
        %v343 = vld [vmem:[%s339 + $0xc] sm:$0xf]
        %v344 = vld [vmem:[%s339 + $0x10] sm:$0xf]
        %v345 = vld [vmem:[%s339 + $0x14] sm:$0xf]
        %v346 = vld [vmem:[%s339 + $0x18] sm:$0xf]
        %v347 = vld [vmem:[%s339 + $0x1c] sm:$0xf]
        %v348 = vld [vmem:[%s339 + $0x20] sm:$0xf]
        %v349 = vld [vmem:[%s339 + $0x24] sm:$0xf]
        %v350 = vld [vmem:[%s339 + $0x28] sm:$0xf]
        %v351 = vld [vmem:[%s339 + $0x2c] sm:$0xf]
        %v352 = vld [vmem:[%s339 + $0x30] sm:$0xf]
        %v353 = vld [vmem:[%s339 + $0x34] sm:$0xf]
        %v354 = vld [vmem:[%s339 + $0x38] sm:$0xf]
        %v355 = vld [vmem:[%s339 + $0x3c] sm:$0xf]
        %v372 = vunpack.c.l.b16 %v340
        %v373 = vunpack.c.l.b16 %v341
        %v374 = vunpack.c.l.b16 %v342
        %v375 = vunpack.c.l.b16 %v343
        %v376 = vunpack.c.l.b16 %v344
        %v377 = vunpack.c.l.b16 %v345
        %v378 = vunpack.c.l.b16 %v346
        %v379 = vunpack.c.l.b16 %v347
        %v380 = vunpack.c.l.b16 %v348
        %v381 = vunpack.c.l.b16 %v349
        %v382 = vunpack.c.l.b16 %v350
        %v383 = vunpack.c.l.b16 %v351
        %v384 = vunpack.c.l.b16 %v352
        %v385 = vunpack.c.l.b16 %v353
        %v386 = vunpack.c.l.b16 %v354
        %v387 = vunpack.c.l.b16 %v355
        %v388 = vpack.c.b16 %v373, %v372
        %v389 = vpack.c.b16 %v375, %v374
        %v390 = vpack.c.b16 %v377, %v376
        %v391 = vpack.c.b16 %v379, %v378
        %v392 = vpack.c.b16 %v381, %v380
        %v393 = vpack.c.b16 %v383, %v382
        %v394 = vpack.c.b16 %v385, %v384
        %v395 = vpack.c.b16 %v387, %v386
        %404 = vmatprep.subr.bf16.mxu0 0
        %405 = vmatpush1.bf16.msra.mxu0 %v388
        %406 = vmatprep.subr.bf16.mxu0 0
        %407 = vmatpush1.bf16.msra.mxu0 %v389
        %408 = vmatprep.subr.bf16.mxu0 0
        %409 = vmatpush1.bf16.msra.mxu0 %v390
        %410 = vmatprep.subr.bf16.mxu0 0
        %411 = vmatpush1.bf16.msra.mxu0 %v391
        %412 = vmatprep.subr.bf16.mxu0 0
        %413 = vmatpush1.bf16.msra.mxu0 %v392
        %414 = vmatprep.subr.bf16.mxu0 0
        %415 = vmatpush1.bf16.msra.mxu0 %v393
        %416 = vmatprep.subr.bf16.mxu0 0
        %417 = vmatpush1.bf16.msra.mxu0 %v394
        %418 = vmatprep.subr.bf16.mxu0 0
        %419 = vmatpush1.bf16.msra.mxu0 %v395
        %420 = vmatprep.subr.bf16.mxu0 0
        %421 = vmatpush1.bf16.msra.mxu0 0
        %422 = vmatprep.subr.bf16.mxu0 0
        %423 = vmatpush1.bf16.msra.mxu0 0
        %424 = vmatprep.subr.bf16.mxu0 0
        %425 = vmatpush1.bf16.msra.mxu0 0
        %426 = vmatprep.subr.bf16.mxu0 0
        %427 = vmatpush1.bf16.msra.mxu0 0
        %428 = vmatprep.subr.bf16.mxu0 0
        %429 = vmatpush1.bf16.msra.mxu0 0
        %430 = vmatprep.subr.bf16.mxu0 0
        %431 = vmatpush1.bf16.msra.mxu0 0
        %432 = vmatprep.subr.bf16.mxu0 0
        %433 = vmatpush1.bf16.msra.mxu0 0
        %434 = vmatprep.subr.bf16.mxu0 0
        %435 = vmatpush1.bf16.msra.mxu0 0
        %436 = vmatprep.mubr.bf16.mxu0 0
        %437 = vmatmul.mubr.bf16.gmra.mrb[0].mxu0 %v338
        %v438 = vpop.f32.mrb[0].mxu0
        %v439 = vadd.f32 0.0, %v438
        %v440 = vpop.f32.mrb[0].mxu0
        %v441 = vpop.f32.mrb[0].mxu0
        %v442 = vadd.f32 0.0, %v441
        %v443 = vpop.f32.mrb[0].mxu0
        %444 = vdwg.mxu0
        %v461 = vunpack.c.l.b16 %v322
        %v462 = vunpack.c.l.b16 %v323
        %v463 = vunpack.c.l.b16 %v324
        %v464 = vunpack.c.l.b16 %v325
        %v465 = vunpack.c.l.b16 %v326
        %v466 = vunpack.c.l.b16 %v327
        %v467 = vunpack.c.l.b16 %v328
        %v468 = vunpack.c.l.b16 %v329
        %v469 = vunpack.c.l.b16 %v330
        %v470 = vunpack.c.l.b16 %v331
        %v471 = vunpack.c.l.b16 %v332
        %v472 = vunpack.c.l.b16 %v333
        %v473 = vunpack.c.l.b16 %v334
        %v474 = vunpack.c.l.b16 %v335
        %v475 = vunpack.c.l.b16 %v336
        %v476 = vunpack.c.l.b16 %v337
        %v477 = vpack.c.b16 %v462, %v461
        %v478 = vpack.c.b16 %v464, %v463
        %v479 = vpack.c.b16 %v466, %v465
        %v480 = vpack.c.b16 %v468, %v467
        %v481 = vpack.c.b16 %v470, %v469
        %v482 = vpack.c.b16 %v472, %v471
        %v483 = vpack.c.b16 %v474, %v473
        %v484 = vpack.c.b16 %v476, %v475
        %493 = vmatprep.subr.bf16.mxu0 0
        %494 = vmatpush1.bf16.msra.mxu0 %v477
        %495 = vmatprep.subr.bf16.mxu0 0
        %496 = vmatpush1.bf16.msra.mxu0 %v478
        %497 = vmatprep.subr.bf16.mxu0 0
        %498 = vmatpush1.bf16.msra.mxu0 %v479
        %499 = vmatprep.subr.bf16.mxu0 0
        %500 = vmatpush1.bf16.msra.mxu0 %v480
        %501 = vmatprep.subr.bf16.mxu0 0
        %502 = vmatpush1.bf16.msra.mxu0 %v481
        %503 = vmatprep.subr.bf16.mxu0 0
        %504 = vmatpush1.bf16.msra.mxu0 %v482
        %505 = vmatprep.subr.bf16.mxu0 0
        %506 = vmatpush1.bf16.msra.mxu0 %v483
        %507 = vmatprep.subr.bf16.mxu0 0
        %508 = vmatpush1.bf16.msra.mxu0 %v484
        %509 = vmatprep.subr.bf16.mxu0 0
        %510 = vmatpush1.bf16.msra.mxu0 0
        %511 = vmatprep.subr.bf16.mxu0 0
        %512 = vmatpush1.bf16.msra.mxu0 0
        %513 = vmatprep.subr.bf16.mxu0 0
        %514 = vmatpush1.bf16.msra.mxu0 0
        %515 = vmatprep.subr.bf16.mxu0 0
        %516 = vmatpush1.bf16.msra.mxu0 0
        %517 = vmatprep.subr.bf16.mxu0 0
        %518 = vmatpush1.bf16.msra.mxu0 0
        %519 = vmatprep.subr.bf16.mxu0 0
        %520 = vmatpush1.bf16.msra.mxu0 0
        %521 = vmatprep.subr.bf16.mxu0 0
        %522 = vmatpush1.bf16.msra.mxu0 0
        %523 = vmatprep.subr.bf16.mxu0 0
        %524 = vmatpush1.bf16.msra.mxu0 0
        %525 = vmatprep.mubr.bf16.mxu0 0
        %526 = vmatmul.mubr.bf16.gmra.mrb[0].mxu0 %v321
        %v527 = vpop.f32.mrb[0].mxu0
        %v528 = vadd.f32 %v439, %v527
        %v529 = vpop.f32.mrb[0].mxu0
        %v530 = vpop.f32.mrb[0].mxu0
        %v531 = vadd.f32 %v442, %v530
        %v532 = vpop.f32.mrb[0].mxu0
        %533 = vdwg.mxu0
        %v534 = vpack.c.bf16 %v320, %v319
        %s535 = scalar_lea.vmem [#allocation7], 128
        %v536 = vld [vmem:[%s535] sm:$0xf]
        %v537 = vld [vmem:[%s535 + $0x4] sm:$0xf]
        %v538 = vld [vmem:[%s535 + $0x8] sm:$0xf]
        %v539 = vld [vmem:[%s535 + $0xc] sm:$0xf]
        %v540 = vld [vmem:[%s535 + $0x10] sm:$0xf]
        %v541 = vld [vmem:[%s535 + $0x14] sm:$0xf]
        %v542 = vld [vmem:[%s535 + $0x18] sm:$0xf]
        %v543 = vld [vmem:[%s535 + $0x1c] sm:$0xf]
        %v544 = vld [vmem:[%s535 + $0x20] sm:$0xf]
        %v545 = vld [vmem:[%s535 + $0x24] sm:$0xf]
        %v546 = vld [vmem:[%s535 + $0x28] sm:$0xf]
        %v547 = vld [vmem:[%s535 + $0x2c] sm:$0xf]
        %v548 = vld [vmem:[%s535 + $0x30] sm:$0xf]
        %v549 = vld [vmem:[%s535 + $0x34] sm:$0xf]
        %v550 = vld [vmem:[%s535 + $0x38] sm:$0xf]
        %v551 = vld [vmem:[%s535 + $0x3c] sm:$0xf]
        %v568 = vunpack.c.l.b16 %v536
        %v569 = vunpack.c.l.b16 %v537
        %v570 = vunpack.c.l.b16 %v538
        %v571 = vunpack.c.l.b16 %v539
        %v572 = vunpack.c.l.b16 %v540
        %v573 = vunpack.c.l.b16 %v541
        %v574 = vunpack.c.l.b16 %v542
        %v575 = vunpack.c.l.b16 %v543
        %v576 = vunpack.c.l.b16 %v544
        %v577 = vunpack.c.l.b16 %v545
        %v578 = vunpack.c.l.b16 %v546
        %v579 = vunpack.c.l.b16 %v547
        %v580 = vunpack.c.l.b16 %v548
        %v581 = vunpack.c.l.b16 %v549
        %v582 = vunpack.c.l.b16 %v550
        %v583 = vunpack.c.l.b16 %v551
        %v584 = vpack.c.b16 %v569, %v568
        %v585 = vpack.c.b16 %v571, %v570
        %v586 = vpack.c.b16 %v573, %v572
        %v587 = vpack.c.b16 %v575, %v574
        %v588 = vpack.c.b16 %v577, %v576
        %v589 = vpack.c.b16 %v579, %v578
        %v590 = vpack.c.b16 %v581, %v580
        %v591 = vpack.c.b16 %v583, %v582
        %600 = vmatprep.subr.bf16.mxu0 0
        %601 = vmatpush1.bf16.msra.mxu0 %v584
        %602 = vmatprep.subr.bf16.mxu0 0
        %603 = vmatpush1.bf16.msra.mxu0 %v585
        %604 = vmatprep.subr.bf16.mxu0 0
        %605 = vmatpush1.bf16.msra.mxu0 %v586
        %606 = vmatprep.subr.bf16.mxu0 0
        %607 = vmatpush1.bf16.msra.mxu0 %v587
        %608 = vmatprep.subr.bf16.mxu0 0
        %609 = vmatpush1.bf16.msra.mxu0 %v588
        %610 = vmatprep.subr.bf16.mxu0 0
        %611 = vmatpush1.bf16.msra.mxu0 %v589
        %612 = vmatprep.subr.bf16.mxu0 0
        %613 = vmatpush1.bf16.msra.mxu0 %v590
        %614 = vmatprep.subr.bf16.mxu0 0
        %615 = vmatpush1.bf16.msra.mxu0 %v591
        %616 = vmatprep.subr.bf16.mxu0 0
        %617 = vmatpush1.bf16.msra.mxu0 0
        %618 = vmatprep.subr.bf16.mxu0 0
        %619 = vmatpush1.bf16.msra.mxu0 0
        %620 = vmatprep.subr.bf16.mxu0 0
        %621 = vmatpush1.bf16.msra.mxu0 0
        %622 = vmatprep.subr.bf16.mxu0 0
        %623 = vmatpush1.bf16.msra.mxu0 0
        %624 = vmatprep.subr.bf16.mxu0 0
        %625 = vmatpush1.bf16.msra.mxu0 0
        %626 = vmatprep.subr.bf16.mxu0 0
        %627 = vmatpush1.bf16.msra.mxu0 0
        %628 = vmatprep.subr.bf16.mxu0 0
        %629 = vmatpush1.bf16.msra.mxu0 0
        %630 = vmatprep.subr.bf16.mxu0 0
        %631 = vmatpush1.bf16.msra.mxu0 0
        %632 = vmatprep.mubr.bf16.mxu0 0
        %633 = vmatmul.mubr.bf16.gmra.mrb[0].mxu0 %v534
        %v634 = vpop.f32.mrb[0].mxu0
        %v635 = vadd.f32 0.0, %v634
        %v636 = vpop.f32.mrb[0].mxu0
        %v637 = vpop.f32.mrb[0].mxu0
        %v638 = vadd.f32 0.0, %v637
        %v639 = vpop.f32.mrb[0].mxu0
        %640 = vdwg.mxu0
        %v641 = vadd.f32 %v528, %v635
        %v642 = vadd.f32 %v531, %v638
        %v643 = vld [vmem:[%s3] sm:$0x1]
        %v645 = vlaneseq
        %v646 = vshrl.u32 %v645, 7
        %v647 = vsub.s32 0, %v646
        %v648 = vrot.slane %v643, %v647
        %v650 = vadd.f32 %v641, %v648
        %v651 = vadd.f32 %v642, %v648
        %652 = vst [vmem:[%s242] sm:$0xff] %v650
        %653 = vst [vmem:[%s242 + $0x8] sm:$0xff] %v651
        %s654 = sand.u32 %s120, 1
        %s655 = scalar_lea.sflag [#allocation4], %s654
        %s656 = sand.u32 %s120, 1
        %s657 = smul.addr %s656, 16
        %s658 = scalar_lea.vmem [#allocation9], %s657
        // Predicated region
        $region49: #{tpu_custom_call.1} parent=35 // pred_check
          %p659 = pneg %p130
        $region50: #{tpu_custom_call.1} parent=35 // pred_check_branch
          %661 = sbr.rel (%p659) target = $region52
        $region51: #{tpu_custom_call.1} parent=35 // pred_region
          %s662 = smul.u32 2, %s23
          %s664 = ssub.s32 256, 256
          %665 = vsyncadd %s655, %s664
          %s666 = smul.addr %s662, 128
          %s667 = scalar_lea.hbm %s4, %s666
          %s668 = sshll.u32 %s658, 4
          %s669 = int_to_ptr.vmem [resolvable:$true] %s668
          %674 = dma.vmem_to_hbm [thread:$0]  %s669, 256, %s667, %s655, 128, 128, 8
        $region52: #{tpu_custom_call.1} parent=35 // pred_fallthru
          _
      $region36: #{tpu_custom_call.1} parent=5 // pred_fallthru
        _
      %p675 = scmp.le.s32.totalorder 2, %s18
      // Predicated region
      $region53: #{tpu_custom_call.1} parent=5 // pred_check
        %p676 = pneg %p675
      $region54: #{tpu_custom_call.1} parent=5 // pred_check_branch
        %678 = sbr.rel (%p676) target = $region56
      $region55: #{tpu_custom_call.1} parent=5 // pred_region
        %s679 = ssub.s32 %s18, 2
        // Predicated region
        $region57: #{tpu_custom_call.1} parent=55 // pred_check
          %p680 = pneg %p136
        $region58: #{tpu_custom_call.1} parent=55 // pred_check_branch
          %682 = sbr.rel (%p680) target = $region60
        $region59: #{tpu_custom_call.1} parent=55 // pred_region
          %s683 = sand.u32 %s121, 1
          %s684 = scalar_lea.sflag [#allocation4], %s683
          %s685 = sand.u32 %s121, 1
          %s686 = smul.addr %s685, 16
          %s687 = scalar_lea.vmem [#allocation9], %s686
          %688 = dma.done %s684, 256
        $region60: #{tpu_custom_call.1} parent=55 // pred_fallthru
          _
      $region56: #{tpu_custom_call.1} parent=5 // pred_fallthru
        _
    $region6: #{tpu_custom_call.1} parent=1 // loop_footer
      %s22 = sadd.s32 1, %s18
    $region7: #{tpu_custom_call.1} parent=1 // loop_footer_branch
      %17 = sbr.rel target = $region3
    $region8: #{tpu_custom_call.1} parent=1 // loop_exit
      _
    %689 = vsyncpa [#allocation3], 1
    %s690 = scalar_lea.sflag [#allocation3], 1
    %691 = vsyncpa %s690, 1
    %692 = vsyncpa [#allocation8], 1
    %693 = vsyncpa [#allocation4], 1
    %s694 = scalar_lea.sflag [#allocation4], 1
    %695 = vsyncpa %s694, 1
    %696 = vsyncpa [#allocation5], 1
    %s697 = scalar_lea.sflag [#allocation5], 1
    %698 = vsyncpa %s697, 1

</llo_original>
